<compile_context>
chip_gen: v5e
topology: v5e:2x2
jax: 0.10.0
libtpu: 0.0.40
codegen_flags: <defaults>
</compile_context>

<pallas_src>
import functools

import jax
import jax.numpy as jnp
from jax.experimental import pallas as pl
from jax.experimental.pallas import tpu as pltpu

LANES = 128
SUBLANES = 8
# 8192 rows x 128 lanes x 4 B = 4 MiB per f32 input block. Two inputs,
# double-buffered -> ~16 MiB VMEM: fits the 32 MiB scoped budget on
# v5e / v6e / v7x (v7x: 32 of 64 MiB physical, headroom left for Mosaic).
MAX_BLOCK_ROWS = 8192
VMEM_LIMIT_BYTES = 32 * 1024 * 1024


def _cdiv(a, b):
    return -(-a // b)


def _round_up(x, m):
    return ((x + m - 1) // m) * m


def _num_tensorcores_per_chip():
    """Best-effort: 2 on megacore chips (v7x / v4 / v5p), 1 on v5e / v6e."""
    try:
        kind = jax.devices()[0].device_kind.lower()
    except Exception:
        return 1
    for tag in ("v7", "7x", "v4", "v5p"):
        if tag in kind:
            return 2
    return 1


def _huber_kernel(p_ref, t_ref, o_ref, acc_ref, *, delta, block_rows, chains,
                  blocks_per_shard, total_blocks, full_rows, tail):
    i = pl.program_id(0)   # shard ("parallel" -> megacore split on 2-TC chips)
    j = pl.program_id(1)   # row-block within shard (reduction axis)

    @pl.when(j == 0)
    def _():
        acc_ref[...] = jnp.zeros_like(acc_ref)

    # Branchless Huber; cast to f32 inside the kernel (inputs stream in
    # native dtype from HBM).
    p = p_ref[...].astype(jnp.float32)
    t = t_ref[...].astype(jnp.float32)
    e = t - p
    ae = jnp.abs(e)
    m = jnp.minimum(ae, jnp.float32(delta))
    res = 0.5 * m * (2.0 * ae - m)

    # `chains` independent vreg-shaped accumulation chains keep the VALU
    # slots busy instead of one long dependent add chain.
    def _reduced(x):
        return x.reshape(block_rows // (chains * SUBLANES), chains,
                         SUBLANES, LANES).sum(axis=0)

    # Row-level block classification (no per-element int math -> no int32
    # overflow even for very large n).
    logical_block = i * blocks_per_shard + j
    end_row = (logical_block + 1) * block_rows
    is_valid = logical_block < total_blocks          # clamped dup blocks skip
    is_full = jnp.logical_and(is_valid, end_row <= full_rows)
    needs_mask = jnp.logical_and(is_valid, end_row > full_rows)

    @pl.when(is_full)
    def _():
        # Steady-state path: no iota / compare / select work at all.
        acc_ref[...] += _reduced(res)

    @pl.when(needs_mask)
    def _():
        # Boundary block only: mask overhanging rows, the partial last row
        # and the lane-tail pad by global row / lane index. Garbage there
        # (even NaN/Inf) is replaced by 0 before accumulation.
        start_row = logical_block * block_rows
        row_g = start_row + jax.lax.broadcasted_iota(
            jnp.int32, (block_rows, LANES), 0)
        valid = row_g < full_rows
        if tail:
            lane = jax.lax.broadcasted_iota(jnp.int32, (block_rows, LANES), 1)
            valid = jnp.logical_or(
                valid, jnp.logical_and(row_g == full_rows, lane < tail))
        acc_ref[...] += _reduced(jnp.where(valid, res, jnp.float32(0.0)))

    @pl.when(j == pl.num_programs(1) - 1)
    def _():
        o_ref[...] = acc_ref[...].sum(axis=0).reshape(1, SUBLANES, LANES)


def huber_regression_loss(predict, target, delta):
    """Mean Huber loss over all elements, computed in a Pallas TPU kernel."""
    assert predict.shape == target.shape
    n = 1
    for d in predict.shape:
        n *= int(d)
    p = predict.reshape(-1)
    t = target.reshape(-1)

    # Only pad the ragged lane tail (< 128 elements) so the flat array
    # reshapes to a lane-dense (rows, 128) slab; pad is masked in-kernel.
    lane_pad = (-n) % LANES
    if lane_pad:
        p = jnp.pad(p, (0, lane_pad))
        t = jnp.pad(t, (0, lane_pad))
    rows = (n + lane_pad) // LANES
    p2 = p.reshape(rows, LANES)
    t2 = t.reshape(rows, LANES)

    block_rows = min(MAX_BLOCK_ROWS, _round_up(rows, SUBLANES))
    total_blocks = _cdiv(rows, block_rows)

    # As many independent accumulation chains as divide the block cleanly.
    chains = SUBLANES
    while block_rows % (chains * SUBLANES) != 0:
        chains //= 2

    # 2-way shard only on megacore chips (and only if there is enough work);
    # on 1-TC chips a second shard is just a serial split + wasted DMA.
    num_shards = _num_tensorcores_per_chip() if total_blocks >= 2 else 1
    blocks_per_shard = _cdiv(total_blocks, num_shards)

    def in_map(i, j):
        # Clamp so a shard's trailing (empty) block never DMAs out of bounds;
        # the kernel skips its accumulation via the logical-block check.
        return (jnp.minimum(i * blocks_per_shard + j, total_blocks - 1), 0)

    kernel = functools.partial(
        _huber_kernel, delta=float(delta), block_rows=block_rows,
        chains=chains, blocks_per_shard=blocks_per_shard,
        total_blocks=total_blocks, full_rows=n // LANES, tail=n % LANES)

    partial_sums = pl.pallas_call(
        kernel,
        out_shape=jax.ShapeDtypeStruct((num_shards, SUBLANES, LANES),
                                       jnp.float32),
        grid_spec=pltpu.PrefetchScalarGridSpec(
            num_scalar_prefetch=0,
            grid=(num_shards, blocks_per_shard),
            in_specs=[
                pl.BlockSpec((block_rows, LANES), in_map),
                pl.BlockSpec((block_rows, LANES), in_map),
            ],
            out_specs=pl.BlockSpec((1, SUBLANES, LANES), lambda i, j: (i, 0, 0)),
            scratch_shapes=[pltpu.VMEM((chains, SUBLANES, LANES), jnp.float32)],
        ),
        compiler_params=pltpu.CompilerParams(
            dimension_semantics=("parallel", "arbitrary"),
            vmem_limit_bytes=VMEM_LIMIT_BYTES,
        ),
    )(p2, t2)

    # Final cross-lane reduction + mean over the true (unpadded) count.
    return jnp.sum(partial_sums, dtype=jnp.float32) / jnp.float32(n)


def _reference(predict, target, delta):
    e = target.astype(jnp.float32) - predict.astype(jnp.float32)
    ae = jnp.abs(e)
    res = jnp.where(ae <= delta, 0.5 * e * e, delta * ae - 0.5 * delta ** 2)
    return jnp.mean(res)


if __name__ == "__main__":
    key = jax.random.PRNGKey(0)
    k1, k2 = jax.random.split(key)
    # Small shape consistent with an arbitrary regression output, NCHW-like.
    shape = (2, 4, 16, 16)
    predict = jax.random.normal(k1, shape, dtype=jnp.float32)
    target = jax.random.normal(k2, shape, dtype=jnp.float32)
    delta = 1.0

    loss = huber_regression_loss(predict, target, delta)
    loss = jax.block_until_ready(loss)

    ref = _reference(predict, target, delta)
    assert jnp.allclose(loss, ref, rtol=1e-5, atol=1e-6), (loss, ref)
    print("KERNEL_OK")
</pallas_src>

<mosaic_0001>
module attributes {stable_mosaic.version = 11 : i64} {
  func.func @_huber_kernel(%arg0: i32, %arg1: i32, %arg2: memref<16x128xf32, #tpu.memory_space<vmem>>, %arg3: memref<16x128xf32, #tpu.memory_space<vmem>>, %arg4: memref<1x8x128xf32, #tpu.memory_space<vmem>>, %arg5: memref<2x8x128xf32, #tpu.memory_space<vmem>>) attributes {dimension_semantics = [#tpu.dimension_semantics<parallel>, #tpu.dimension_semantics<arbitrary>], iteration_bounds = array<i64: 1, 1>, scalar_prefetch = 0 : i64, scratch_operands = 1 : i64, tpu.core_type = #tpu.core_type<tc>, window_params = [{transform_indices = @transform_0, window_bounds = array<i64: 16, 128>}, {transform_indices = @transform_1, window_bounds = array<i64: 16, 128>}, {transform_indices = @transform_2, window_bounds = array<i64: 1, 8, 128>}]} {
    %c0_i32 = arith.constant 0 : i32
    %0 = arith.cmpi eq, %arg1, %c0_i32 : i32
    %1 = arith.extui %0 : i1 to i32
    %c0_i32_0 = arith.constant 0 : i32
    %2 = arith.cmpi ne, %1, %c0_i32_0 : i32
    scf.if %2 {
      %cst_14 = arith.constant 0.000000e+00 : f32
      %31 = vector.broadcast %cst_14 : f32 to vector<2x8x128xf32>
      %c0_15 = arith.constant 0 : index
      %c0_16 = arith.constant 0 : index
      %c0_17 = arith.constant 0 : index
      %32 = vector.load %arg5[%c0_15, %c0_16, %c0_17] : memref<2x8x128xf32, #tpu.memory_space<vmem>>, vector<2x8x128xf32>
      tpu.vector_store %arg5[%c0_15, %c0_16, %c0_17], %31 {strides = array<i32>} : memref<2x8x128xf32, #tpu.memory_space<vmem>>, vector<2x8x128xf32>,
    } else {
    }
    %c0 = arith.constant 0 : index
    %c0_1 = arith.constant 0 : index
    %3 = vector.load %arg2[%c0, %c0_1] : memref<16x128xf32, #tpu.memory_space<vmem>>, vector<16x128xf32>
    %c0_2 = arith.constant 0 : index
    %c0_3 = arith.constant 0 : index
    %4 = vector.load %arg3[%c0_2, %c0_3] : memref<16x128xf32, #tpu.memory_space<vmem>>, vector<16x128xf32>
    %5 = arith.subf %4, %3 : vector<16x128xf32>
    %6 = math.absf %5 : vector<16x128xf32>
    %cst = arith.constant 1.000000e+00 : f32
    %7 = vector.broadcast %cst : f32 to vector<16x128xf32>
    %8 = arith.minimumf %6, %7 : vector<16x128xf32>
    %cst_4 = arith.constant 5.000000e-01 : f32
    %9 = vector.broadcast %cst_4 : f32 to vector<16x128xf32>
    %10 = arith.mulf %9, %8 : vector<16x128xf32>
    %cst_5 = arith.constant 2.000000e+00 : f32
    %11 = vector.broadcast %cst_5 : f32 to vector<16x128xf32>
    %12 = arith.mulf %11, %6 : vector<16x128xf32>
    %13 = arith.subf %12, %8 : vector<16x128xf32>
    %14 = arith.mulf %10, %13 : vector<16x128xf32>
    %c1_i32 = arith.constant 1 : i32
    %15 = arith.muli %arg0, %c1_i32 : i32
    %16 = arith.addi %15, %arg1 : i32
    %c1_i32_6 = arith.constant 1 : i32
    %17 = arith.addi %16, %c1_i32_6 : i32
    %c16_i32 = arith.constant 16 : i32
    %18 = arith.muli %17, %c16_i32 : i32
    %c1_i32_7 = arith.constant 1 : i32
    %19 = arith.cmpi slt, %16, %c1_i32_7 : i32
    %c16_i32_8 = arith.constant 16 : i32
    %20 = arith.cmpi sle, %18, %c16_i32_8 : i32
    %21 = arith.andi %19, %20 : i1
    %c16_i32_9 = arith.constant 16 : i32
    %22 = arith.cmpi sgt, %18, %c16_i32_9 : i32
    %23 = arith.andi %19, %22 : i1
    %24 = arith.extui %21 : i1 to i32
    %c0_i32_10 = arith.constant 0 : i32
    %25 = arith.cmpi ne, %24, %c0_i32_10 : i32
    scf.if %25 {
      %c0_14 = arith.constant 0 : index
      %c0_15 = arith.constant 0 : index
      %c0_16 = arith.constant 0 : index
      %31 = vector.load %arg5[%c0_14, %c0_15, %c0_16] : memref<2x8x128xf32, #tpu.memory_space<vmem>>, vector<2x8x128xf32>
      %32 = vector.shape_cast %14 : vector<16x128xf32> to vector<1x2x8x128xf32>
      %cst_17 = arith.constant dense<0.000000e+00> : vector<2x8x128xf32>
      %33 = vector.multi_reduction <add>, %32, %cst_17 [0] : vector<1x2x8x128xf32> to vector<2x8x128xf32>
      %34 = arith.addf %31, %33 : vector<2x8x128xf32>
      %c0_18 = arith.constant 0 : index
      %c0_19 = arith.constant 0 : index
      %c0_20 = arith.constant 0 : index
      %35 = vector.load %arg5[%c0_18, %c0_19, %c0_20] : memref<2x8x128xf32, #tpu.memory_space<vmem>>, vector<2x8x128xf32>
      tpu.vector_store %arg5[%c0_18, %c0_19, %c0_20], %34 {strides = array<i32>} : memref<2x8x128xf32, #tpu.memory_space<vmem>>, vector<2x8x128xf32>,
    } else {
    }
    %26 = arith.extui %23 : i1 to i32
    %c0_i32_11 = arith.constant 0 : i32
    %27 = arith.cmpi ne, %26, %c0_i32_11 : i32
    scf.if %27 {
      %c16_i32_14 = arith.constant 16 : i32
      %31 = arith.muli %16, %c16_i32_14 : i32
      %32 = tpu.iota {dimensions = array<i32: 0>} : vector<16x128xi32>
      %33 = vector.broadcast %31 : i32 to vector<16x128xi32>
      %34 = arith.addi %33, %32 : vector<16x128xi32>
      %c16_i32_15 = arith.constant 16 : i32
      %35 = vector.broadcast %c16_i32_15 : i32 to vector<16x128xi32>
      %36 = arith.cmpi slt, %34, %35 : vector<16x128xi32>
      %c0_16 = arith.constant 0 : index
      %c0_17 = arith.constant 0 : index
      %c0_18 = arith.constant 0 : index
      %37 = vector.load %arg5[%c0_16, %c0_17, %c0_18] : memref<2x8x128xf32, #tpu.memory_space<vmem>>, vector<2x8x128xf32>
      %cst_19 = arith.constant 0.000000e+00 : f32
      %38 = vector.broadcast %cst_19 : f32 to vector<16x128xf32>
      %39 = arith.select %36, %14, %38 : vector<16x128xi1>, vector<16x128xf32>
      %40 = vector.shape_cast %39 : vector<16x128xf32> to vector<1x2x8x128xf32>
      %cst_20 = arith.constant dense<0.000000e+00> : vector<2x8x128xf32>
      %41 = vector.multi_reduction <add>, %40, %cst_20 [0] : vector<1x2x8x128xf32> to vector<2x8x128xf32>
      %42 = arith.addf %37, %41 : vector<2x8x128xf32>
      %c0_21 = arith.constant 0 : index
      %c0_22 = arith.constant 0 : index
      %c0_23 = arith.constant 0 : index
      %43 = vector.load %arg5[%c0_21, %c0_22, %c0_23] : memref<2x8x128xf32, #tpu.memory_space<vmem>>, vector<2x8x128xf32>
      tpu.vector_store %arg5[%c0_21, %c0_22, %c0_23], %42 {strides = array<i32>} : memref<2x8x128xf32, #tpu.memory_space<vmem>>, vector<2x8x128xf32>,
    } else {
    }
    %c0_i32_12 = arith.constant 0 : i32
    %28 = arith.cmpi eq, %arg1, %c0_i32_12 : i32
    %29 = arith.extui %28 : i1 to i32
    %c0_i32_13 = arith.constant 0 : i32
    %30 = arith.cmpi ne, %29, %c0_i32_13 : i32
    scf.if %30 {
      %c0_14 = arith.constant 0 : index
      %c0_15 = arith.constant 0 : index
      %c0_16 = arith.constant 0 : index
      %31 = vector.load %arg5[%c0_14, %c0_15, %c0_16] : memref<2x8x128xf32, #tpu.memory_space<vmem>>, vector<2x8x128xf32>
      %cst_17 = arith.constant dense<0.000000e+00> : vector<8x128xf32>
      %32 = vector.multi_reduction <add>, %31, %cst_17 [0] : vector<2x8x128xf32> to vector<8x128xf32>
      %33 = vector.shape_cast %32 : vector<8x128xf32> to vector<1x8x128xf32>
      %c0_18 = arith.constant 0 : index
      %c0_19 = arith.constant 0 : index
      %c0_20 = arith.constant 0 : index
      %34 = vector.load %arg4[%c0_18, %c0_19, %c0_20] : memref<1x8x128xf32, #tpu.memory_space<vmem>>, vector<1x8x128xf32>
      tpu.vector_store %arg4[%c0_18, %c0_19, %c0_20], %33 {strides = array<i32>} : memref<1x8x128xf32, #tpu.memory_space<vmem>>, vector<1x8x128xf32>,
    } else {
    }
    return
  }
  func.func @transform_0(%arg0: i32, %arg1: i32) -> (i32, i32) {
    %c1_i32 = arith.constant 1 : i32
    %0 = arith.muli %arg0, %c1_i32 : i32
    %1 = arith.addi %0, %arg1 : i32
    %c0_i32 = arith.constant 0 : i32
    %2 = arith.minsi %1, %c0_i32 : i32
    %c0_i32_0 = arith.constant 0 : i32
    %c0_i32_1 = arith.constant 0 : i32
    return %2, %c0_i32_0 : i32, i32
  }
  func.func @transform_1(%arg0: i32, %arg1: i32) -> (i32, i32) {
    %c1_i32 = arith.constant 1 : i32
    %0 = arith.muli %arg0, %c1_i32 : i32
    %1 = arith.addi %0, %arg1 : i32
    %c0_i32 = arith.constant 0 : i32
    %2 = arith.minsi %1, %c0_i32 : i32
    %c0_i32_0 = arith.constant 0 : i32
    %c0_i32_1 = arith.constant 0 : i32
    return %2, %c0_i32_0 : i32, i32
  }
  func.func @transform_2(%arg0: i32, %arg1: i32) -> (i32, i32, i32) {
    %c0_i32 = arith.constant 0 : i32
    %c0_i32_0 = arith.constant 0 : i32
    %c0_i32_1 = arith.constant 0 : i32
    return %arg0, %c0_i32, %c0_i32_0 : i32, i32, i32
  }
}

</mosaic_0001>

<llo_original>
// kernel: tpu_custom_call.1
$region0: #{tpu_custom_call.1}
  #allocation0 [shape = 'u32[]', space=smem, size = 0x4, offset = 0x4, fixed_abs, tag = 'smem constant byte address 0x4 - core index']
  #allocation1 [shape = 'u32[72,128]{1,0:T(1,128)}', space=vmem, size = 0x9000, scoped, tag = 'internal scratch']
  #allocation2 [shape = 'f32[2,8,128]{2,1,0:T(8,128)}', space=vmem, size = 0x2000, scoped, tag = 'scratch operand']
  %s0 = inlined_call_operand.hbm [shape: f32[16,128], index: 0, kind: input, shape index: {}]
  %s1 = inlined_call_operand.hbm [shape: f32[16,128], index: 1, kind: input, shape index: {}]
  %s2 = inlined_call_operand.hbm [shape: f32[1,8,128], index: 2, kind: output, shape index: {}]
  %s3 = sld [smem:[#allocation0]]
  $region42: #{tpu_custom_call.1} parent=0
    _
  %s5 = ssub.s32 1, %s3
  %s6 = scalar_select 0, %s5, %s3
  $region1: #{tpu_custom_call.1} parent=0
    #allocation3 [shape = 'u8[8192]{0}', space=vmem, size = 0x2000, scoped, tag = 'input window, operand 0, single buffered']
    #allocation4 [shape = 's32[1]{0}', space=sflag, size = 0x4, scoped, tag = 'scoped memory for tpu_custom_call.1']
    #allocation5 [shape = 's32[1]{0}', space=sflag, size = 0x4, scoped, tag = 'scoped memory for tpu_custom_call.1']
    #allocation6 [shape = 'u8[8192]{0}', space=vmem, size = 0x2000, scoped, tag = 'input window, operand 1, single buffered']
    #allocation7 [shape = 's32[1]{0}', space=sflag, size = 0x4, scoped, tag = 'scoped memory for tpu_custom_call.1']
    #allocation8 [shape = 'u8[4096]{0}', space=vmem, size = 0x1000, scoped, tag = 'output window, operand 0, single buffered']
    %7 = vsyncpa [#allocation4], 0
    %8 = vsyncpa [#allocation7], 0
    %9 = vsyncpa [#allocation5], 0
    // Predicated region
    $region2: #{tpu_custom_call.1} parent=1 // pred_check
      _
    $region3: #{tpu_custom_call.1} parent=1 // pred_check_branch
      %11 = sbr.rel (0) target = $region5
    $region4: #{tpu_custom_call.1} parent=1 // pred_region
      %s12 = sadd.s32 0, 0
      %p13 = scmp.lt.s32.totalorder %s12, 0
      %s14 = scalar_select %p13, %s12, 0
      %s15 = smul.u32 2, %s14
      %17 = vsyncadd [#allocation4], 0
      %s18 = smul.addr %s15, 8
      %s19 = scalar_lea.hbm %s0, %s18
      %s20 = sshll.u32 %s19, 4
      %s21 = int_to_ptr.hbm [resolvable:$true] %s20
      %s22 = sshll.u32 [#allocation3], 4
      %s23 = int_to_ptr.vmem [resolvable:$true] %s22
      %28 = dma.hbm_to_vmem [thread:$0]  %s21, 256, %s23, [#allocation4], 128, 128, 8
    $region5: #{tpu_custom_call.1} parent=1 // pred_fallthru
      _
    // Predicated region
    $region6: #{tpu_custom_call.1} parent=1 // pred_check
      _
    $region7: #{tpu_custom_call.1} parent=1 // pred_check_branch
      %30 = sbr.rel (0) target = $region9
    $region8: #{tpu_custom_call.1} parent=1 // pred_region
      %s31 = sadd.s32 0, 0
      %p32 = scmp.lt.s32.totalorder %s31, 0
      %s33 = scalar_select %p32, %s31, 0
      %s34 = smul.u32 2, %s33
      %36 = vsyncadd [#allocation7], 0
      %s37 = smul.addr %s34, 8
      %s38 = scalar_lea.hbm %s1, %s37
      %s39 = sshll.u32 %s38, 4
      %s40 = int_to_ptr.hbm [resolvable:$true] %s39
      %s41 = sshll.u32 [#allocation6], 4
      %s42 = int_to_ptr.vmem [resolvable:$true] %s41
      %47 = dma.hbm_to_vmem [thread:$0]  %s40, 256, %s42, [#allocation7], 128, 128, 8
    $region9: #{tpu_custom_call.1} parent=1 // pred_fallthru
      _
    // Predicated region
    $region10: #{tpu_custom_call.1} parent=1 // pred_check
      _
    $region11: #{tpu_custom_call.1} parent=1 // pred_check_branch
      %49 = sbr.rel (0) target = $region13
    $region12: #{tpu_custom_call.1} parent=1 // pred_region
      %51 = dma.done [#allocation4], 256
    $region13: #{tpu_custom_call.1} parent=1 // pred_fallthru
      _
    // Predicated region
    $region14: #{tpu_custom_call.1} parent=1 // pred_check
      _
    $region15: #{tpu_custom_call.1} parent=1 // pred_check_branch
      %53 = sbr.rel (0) target = $region17
    $region16: #{tpu_custom_call.1} parent=1 // pred_region
      %55 = dma.done [#allocation7], 256
    $region17: #{tpu_custom_call.1} parent=1 // pred_fallthru
      _
    %s56 = sadd.s32 0, 0
    %p57 = scmp.lt.s32.totalorder %s56, 0
    %s58 = scalar_select %p57, %s56, 0
    %s59 = smul.u32 2, %s58
    %s60 = sadd.s32 0, 0
    %p61 = scmp.lt.s32.totalorder %s60, 0
    %s62 = scalar_select %p61, %s60, 0
    %s63 = smul.u32 2, %s62
    %p64 = scmp.eq.s32.totalorder 0, 0
    // Predicated region
    $region18: #{tpu_custom_call.1} parent=1 // pred_check
      %p65 = pneg %p64
    $region19: #{tpu_custom_call.1} parent=1 // pred_check_branch
      %67 = sbr.rel (%p65) target = $region21
    $region20: #{tpu_custom_call.1} parent=1 // pred_region
      %68 = vst [vmem:[#allocation2] sm:$0xff] 0.0
      %69 = vst [vmem:[#allocation2 + $0x8] sm:$0xff] 0.0
    $region21: #{tpu_custom_call.1} parent=1 // pred_fallthru
      _
    %v70 = vld [vmem:[#allocation3] sm:$0xff]
    %v71 = vld [vmem:[#allocation3 + $0x8] sm:$0xff]
    %v72 = vld [vmem:[#allocation6] sm:$0xff]
    %v73 = vld [vmem:[#allocation6 + $0x8] sm:$0xff]
    %v74 = vsub.f32 %v72, %v70
    %v75 = vsub.f32 %v73, %v71
    %v76 = vand.u32 2147483647, %v74
    %v77 = vand.u32 2147483647, %v75
    %v78 = vmin.f32 %v76, 1.0
    %v79 = vmin.f32 %v77, 1.0
    %v80 = vmul.f32 %v78, 0.5
    %v81 = vmul.f32 %v79, 0.5
    %v82 = vmul.f32 %v76, 2.0
    %v83 = vmul.f32 %v77, 2.0
    %v84 = vsub.f32 %v82, %v78
    %v85 = vsub.f32 %v83, %v79
    %v86 = vmul.f32 %v80, %v84
    %v87 = vmul.f32 %v81, %v85
    %s88 = sadd.s32 0, 0
    %s89 = sadd.s32 %s88, 1
    %s90 = smul.u32 %s89, 16
    %p91 = scmp.lt.s32.totalorder %s88, 1
    %p92 = scmp.le.s32.totalorder %s90, 16
    %p93 = pnand %p91, %p92
    %p94 = pneg %p93
    %p95 = scmp.gt.s32.totalorder %s90, 16
    %p96 = pnand %p91, %p95
    %p97 = pneg %p96
    // Predicated region
    $region22: #{tpu_custom_call.1} parent=1 // pred_check
      _
    $region23: #{tpu_custom_call.1} parent=1 // pred_check_branch
      %99 = sbr.rel (%p93) target = $region25
    $region24: #{tpu_custom_call.1} parent=1 // pred_region
      %v100 = vld [vmem:[#allocation2] sm:$0xff]
      %v101 = vld [vmem:[#allocation2 + $0x8] sm:$0xff]
      %v102 = vadd.f32 %v86, 0.0
      %v103 = vadd.f32 %v87, 0.0
      %v104 = vadd.f32 %v100, %v102
      %v105 = vadd.f32 %v101, %v103
      %106 = vst [vmem:[#allocation2] sm:$0xff] %v104
      %107 = vst [vmem:[#allocation2 + $0x8] sm:$0xff] %v105
    $region25: #{tpu_custom_call.1} parent=1 // pred_fallthru
      _
    // Predicated region
    $region26: #{tpu_custom_call.1} parent=1 // pred_check
      _
    $region27: #{tpu_custom_call.1} parent=1 // pred_check_branch
      %109 = sbr.rel (%p96) target = $region29
    $region28: #{tpu_custom_call.1} parent=1 // pred_region
      %s110 = smul.u32 %s88, 16
      %v111 = vlaneseq
      %v112 = vshrl.u32 %v111, 7
      %v113 = vadd.s32 %v112, 8
      %v114 = vstv %s110
      %v115 = vadd.s32 %v114, %v112
      %v116 = vadd.s32 %v114, %v113
      %vm117 = vcmp.lt.s32.totalorder %v115, 16
      %vm118 = vcmp.lt.s32.totalorder %v116, 16
      %v119 = vld [vmem:[#allocation2] sm:$0xff]
      %v120 = vld [vmem:[#allocation2 + $0x8] sm:$0xff]
      %v121 = vsel %vm117, %v86, 0.0
      %v122 = vsel %vm118, %v87, 0.0
      %v123 = vadd.f32 %v121, 0.0
      %v124 = vadd.f32 %v122, 0.0
      %v125 = vadd.f32 %v119, %v123
      %v126 = vadd.f32 %v120, %v124
      %127 = vst [vmem:[#allocation2] sm:$0xff] %v125
      %128 = vst [vmem:[#allocation2 + $0x8] sm:$0xff] %v126
    $region29: #{tpu_custom_call.1} parent=1 // pred_fallthru
      _
    // Predicated region
    $region30: #{tpu_custom_call.1} parent=1 // pred_check
      %p129 = pneg %p64
    $region31: #{tpu_custom_call.1} parent=1 // pred_check_branch
      %131 = sbr.rel (%p129) target = $region33
    $region32: #{tpu_custom_call.1} parent=1 // pred_region
      %v132 = vld [vmem:[#allocation2] sm:$0xff]
      %v133 = vld [vmem:[#allocation2 + $0x8] sm:$0xff]
      %v134 = vadd.f32 %v132, %v133
      %135 = vst [vmem:[#allocation8] sm:$0xff] %v134
    $region33: #{tpu_custom_call.1} parent=1 // pred_fallthru
      _
    // Predicated region
    $region34: #{tpu_custom_call.1} parent=1 // pred_check
      _
    $region35: #{tpu_custom_call.1} parent=1 // pred_check_branch
      %137 = sbr.rel (0) target = $region37
    $region36: #{tpu_custom_call.1} parent=1 // pred_region
      %139 = vsyncadd [#allocation5], 0
      %s141 = sshll.u32 [#allocation8], 4
      %s142 = int_to_ptr.vmem [resolvable:$true] %s141
      %s143 = sshll.u32 %s2, 4
      %s144 = int_to_ptr.hbm [resolvable:$true] %s143
      %146 = dma.vmem_to_hbm [thread:$0]  %s142, 128, %s144, [#allocation5]
    $region37: #{tpu_custom_call.1} parent=1 // pred_fallthru
      _
    // Predicated region
    $region38: #{tpu_custom_call.1} parent=1 // pred_check
      _
    $region39: #{tpu_custom_call.1} parent=1 // pred_check_branch
      %148 = sbr.rel (0) target = $region41
    $region40: #{tpu_custom_call.1} parent=1 // pred_region
      %150 = dma.done [#allocation5], 128
    $region41: #{tpu_custom_call.1} parent=1 // pred_fallthru
      _
    %151 = vsyncpa [#allocation4], 1
    %152 = vsyncpa [#allocation7], 1
    %153 = vsyncpa [#allocation5], 1

</llo_original>
